<compile_context>
chip_gen: v7x
topology: tpu7x:2x2x1
jax: 0.10.0
libtpu: 0.0.40
codegen_flags: <defaults>
</compile_context>

<pallas_src>
import math
import numpy as np
import jax
import jax.numpy as jnp
from jax.experimental import pallas as pl
from jax.experimental.pallas import tpu as pltpu


def affinity_kernel(edges_ref, x_ref, we_ref, vth_ref, vph_ref, const_ref, out_ref):
    # edges_ref : (B*E, SBLK)   lane block of flattened edges
    # x_ref     : (B*N, W)      flattened node features (grid-resident)
    # we_ref    : (B, B*E)      block-diagonal edge-projection weights
    # vth_ref   : (B, B*N)      block-diagonal folded theta weights
    # vph_ref   : (B, B*N)      block-diagonal folded phi weights
    # const_ref : (1, 1) SMEM   folded bias constant
    # out_ref   : (B, SBLK)     lane-dense output block
    W = x_ref.shape[1]
    sblk = out_ref.shape[1]
    col0 = pl.program_id(0) * sblk                      # global lane offset of block

    # Edge-channel contribution of the 1x1 conv, all batches in one matmul.
    edge_t = jnp.dot(we_ref[...], edges_ref[...],
                     preferred_element_type=jnp.float32)            # (B, SBLK)

    # Folded node terms r[b,i] = v_th . x[b,:,i] and c[b,j] = v_ph . x[b,:,j].
    r = jnp.dot(vth_ref[...], x_ref[...],
                preferred_element_type=jnp.float32)                 # (B, W)
    c = jnp.dot(vph_ref[...], x_ref[...],
                preferred_element_type=jnp.float32)                 # (B, W)

    # One-hot row/col expansion masks generated on the VPU (no HBM traffic):
    #   exp_r[p, s] = 1 iff i(s) == p ; exp_c[p, s] = 1 iff j(s) == p   (s = i*W + j)
    lane = jax.lax.broadcasted_iota(jnp.int32, (W, sblk), 1) + col0
    row = jax.lax.broadcasted_iota(jnp.int32, (W, sblk), 0)
    if (W & (W - 1)) == 0:                              # power-of-two fast path
        shift = W.bit_length() - 1
        i_idx = lane >> shift
        j_idx = lane & (W - 1)
    else:
        i_idx = lane // W
        j_idx = lane - i_idx * W
    exp_r = (i_idx == row).astype(jnp.float32)
    exp_c = (j_idx == row).astype(jnp.float32)

    # Broadcast r over columns / c over rows straight into the lane-dense layout
    # (matmul against one-hot masks: no transposes, no (W,W,C) temporaries).
    r_t = jnp.dot(r, exp_r, preferred_element_type=jnp.float32)     # (B, SBLK)
    c_t = jnp.dot(c, exp_c, preferred_element_type=jnp.float32)     # (B, SBLK)

    out_ref[...] = (edge_t + r_t + c_t + const_ref[0, 0]).astype(out_ref.dtype)


def fold_affinity_params(params, batch_size, edge_nin):
    """Fold the three 1x1 convs into block-diagonal per-batch weight rows.

    Call once per parameter set; the result feeds the jitted per-call path.
    """
    theta_W, theta_b, phi_W, phi_b, proj_W, proj_b = params
    C = theta_W.shape[0]
    E = edge_nin
    B = batch_size

    w_e = proj_W[0, :E]                                  # (E,)
    w_th = proj_W[0, E:E + C]                            # (C,)
    w_ph = proj_W[0, E + C:]                             # (C,)
    v_th = theta_W.T @ w_th                              # (N,)
    v_ph = phi_W.T @ w_ph                                # (N,)
    const = jnp.dot(w_th, theta_b) + jnp.dot(w_ph, phi_b)
    if proj_b is not None:
        const = const + proj_b.reshape(())

    eyeB = jnp.eye(B, dtype=jnp.float32)
    we_blk = jnp.kron(eyeB, w_e[None, :]).astype(jnp.float32)       # (B, B*E)
    vth_blk = jnp.kron(eyeB, v_th[None, :]).astype(jnp.float32)     # (B, B*N)
    vph_blk = jnp.kron(eyeB, v_ph[None, :]).astype(jnp.float32)     # (B, B*N)
    const = const.reshape(1, 1).astype(jnp.float32)
    return we_blk, vth_blk, vph_blk, const


@jax.jit
def affinity_pallas(edges, x, we_blk, vth_blk, vph_blk, const):
    """edges: (B, E, W, W); x: (B, N, W); folded params. Returns (B, 1, W, W)."""
    B, E, W, W2 = edges.shape
    N = x.shape[1]
    assert W == W2 == x.shape[2]
    S = W * W

    # Free contiguous reshapes (no transposes, no copies).
    edges_flat = edges.reshape(B * E, S).astype(jnp.float32)
    x_flat = x.reshape(B * N, W).astype(jnp.float32)

    # Hardware/size-aware grid: only split the lane axis (for the 2 v7x
    # TensorCores) when each block is big enough to amortize the per-step /
    # per-core overhead; at small S a single step wins on every generation.
    n_blocks = 2 if (S >= 2048 and S % 256 == 0) else 1
    sblk = S // n_blocks

    out2 = pl.pallas_call(
        affinity_kernel,
        out_shape=jax.ShapeDtypeStruct((B, S), jnp.float32),
        grid_spec=pltpu.PrefetchScalarGridSpec(
            num_scalar_prefetch=0,
            grid=(n_blocks,),
            in_specs=[
                pl.BlockSpec((B * E, sblk), lambda s: (0, s)),
                pl.BlockSpec((B * N, W), lambda s: (0, 0)),
                pl.BlockSpec((B, B * E), lambda s: (0, 0)),
                pl.BlockSpec((B, B * N), lambda s: (0, 0)),
                pl.BlockSpec((B, B * N), lambda s: (0, 0)),
                pl.BlockSpec(memory_space=pltpu.MemorySpace.SMEM),
            ],
            out_specs=pl.BlockSpec((B, sblk), lambda s: (0, s)),
        ),
        compiler_params=pltpu.CompilerParams(
            dimension_semantics=("parallel",)),
    )(edges_flat, x_flat, we_blk, vth_blk, vph_blk, const)

    # Free contiguous reshape back to NCHW.
    return out2.reshape(B, 1, W, W)


def affinity1d(adj, edges, x, params):
    """Convenience wrapper matching the PyTorch forward signature.

    For repeated calls, hoist fold_affinity_params() out of the loop and call
    the jitted affinity_pallas() directly (as done in __main__).
    """
    del adj  # only used for the spatial size, which edges already carries
    folded = fold_affinity_params(params, x.shape[0], edges.shape[1])
    return affinity_pallas(edges, x, *folded)


def reference(adj, edges, x, params):
    """Pure-JAX re-implementation of the PyTorch forward."""
    theta_W, theta_b, phi_W, phi_b, proj_W, proj_b = params
    B = x.shape[0]
    C = theta_W.shape[0]
    h = adj.shape[-1]
    theta_x = jnp.einsum('cn,bnw->bcw', theta_W, x) + theta_b[None, :, None]
    phi_x = jnp.einsum('cn,bnw->bcw', phi_W, x) + phi_b[None, :, None]
    theta_rep = jnp.broadcast_to(theta_x[:, :, :, None], (B, C, h, h))
    phi_rep = jnp.broadcast_to(phi_x[:, :, None, :], (B, C, h, h))
    feat = jnp.concatenate([edges, theta_rep, phi_rep], axis=1)
    f = jnp.einsum('oc,bchw->bohw', proj_W, feat)
    if proj_b is not None:
        f = f + proj_b.reshape(1, -1, 1, 1)
    return f


if __name__ == "__main__":
    # Small shapes consistent with the module: nin=32, compress=2 -> C=16, edge_nin=8.
    B, W = 2, 16
    nin, edge_nin, compress = 32, 8, 2
    C = nin // compress

    key = jax.random.PRNGKey(0)
    keys = jax.random.split(key, 8)

    adj = jax.random.normal(keys[0], (B, W, W), dtype=jnp.float32)
    edges = jax.random.normal(keys[1], (B, edge_nin, W, W), dtype=jnp.float32)
    x = jax.random.normal(keys[2], (B, nin, W), dtype=jnp.float32)

    # Parameters (shapes implied by the module's __init__); Conv1d biases on,
    # concat_project bias off (module default bias=False).
    theta_W = jax.random.normal(keys[3], (C, nin), dtype=jnp.float32) / math.sqrt(nin)
    theta_b = 0.1 * jax.random.normal(keys[4], (C,), dtype=jnp.float32)
    phi_W = jax.random.normal(keys[5], (C, nin), dtype=jnp.float32) / math.sqrt(nin)
    phi_b = 0.1 * jax.random.normal(keys[6], (C,), dtype=jnp.float32)
    proj_W = jax.random.normal(keys[7], (1, edge_nin + 2 * C),
                               dtype=jnp.float32) / math.sqrt(edge_nin + 2 * C)
    proj_b = None

    params = (theta_W, theta_b, phi_W, phi_b, proj_W, proj_b)

    # Fold parameters once (outside the hot path), then call the jitted kernel.
    folded = jax.block_until_ready(fold_affinity_params(params, B, edge_nin))
    out = jax.block_until_ready(affinity_pallas(edges, x, *folded))
    ref = jax.block_until_ready(reference(adj, edges, x, params))

    np.testing.assert_allclose(np.asarray(out), np.asarray(ref), rtol=1e-4, atol=1e-4)
    assert out.shape == (B, 1, W, W)

    print("KERNEL_OK")
</pallas_src>

<mosaic_0001>
module attributes {stable_mosaic.version = 11 : i64} {
  func.func @affinity_kernel(%arg0: i32, %arg1: memref<16x256xf32, #tpu.memory_space<vmem>>, %arg2: memref<64x16xf32, #tpu.memory_space<vmem>>, %arg3: memref<2x16xf32, #tpu.memory_space<vmem>>, %arg4: memref<2x64xf32, #tpu.memory_space<vmem>>, %arg5: memref<2x64xf32, #tpu.memory_space<vmem>>, %arg6: memref<1x1xf32, #tpu.memory_space<smem>>, %arg7: memref<2x256xf32, #tpu.memory_space<vmem>>) attributes {dimension_semantics = [#tpu.dimension_semantics<parallel>], iteration_bounds = array<i64: 1>, scalar_prefetch = 0 : i64, scratch_operands = 0 : i64, tpu.core_type = #tpu.core_type<tc>, window_params = [{transform_indices = @transform_0, window_bounds = array<i64: 16, 256>}, {pipeline_mode = #tpu.pipeline_mode<synchronous>, transform_indices = @transform_1, window_bounds = array<i64: 64, 16>}, {pipeline_mode = #tpu.pipeline_mode<synchronous>, transform_indices = @transform_2, window_bounds = array<i64: 2, 16>}, {pipeline_mode = #tpu.pipeline_mode<synchronous>, transform_indices = @transform_3, window_bounds = array<i64: 2, 64>}, {pipeline_mode = #tpu.pipeline_mode<synchronous>, transform_indices = @transform_4, window_bounds = array<i64: 2, 64>}, {transform_indices = @transform_5, window_bounds = array<i64: 1, 1>}, {transform_indices = @transform_6, window_bounds = array<i64: 2, 256>}]} {
    %c256_i32 = arith.constant 256 : i32
    %0 = arith.muli %arg0, %c256_i32 : i32
    %c0 = arith.constant 0 : index
    %c0_0 = arith.constant 0 : index
    %1 = vector.load %arg3[%c0, %c0_0] : memref<2x16xf32, #tpu.memory_space<vmem>>, vector<2x16xf32>
    %c0_1 = arith.constant 0 : index
    %c0_2 = arith.constant 0 : index
    %2 = vector.load %arg1[%c0_1, %c0_2] : memref<16x256xf32, #tpu.memory_space<vmem>>, vector<16x256xf32>
    %cst = arith.constant dense<0.000000e+00> : vector<2x256xf32>
    %3 = tpu.matmul %1, %2, %cst {dimension_numbers = #tpu.dot_dimension_numbers<[1], [0], [0], [1], [0, 0, 1, 1], [], []>} : vector<2x16xf32>, vector<16x256xf32>, vector<2x256xf32> -> vector<2x256xf32>
    %c0_3 = arith.constant 0 : index
    %c0_4 = arith.constant 0 : index
    %4 = vector.load %arg4[%c0_3, %c0_4] : memref<2x64xf32, #tpu.memory_space<vmem>>, vector<2x64xf32>
    %c0_5 = arith.constant 0 : index
    %c0_6 = arith.constant 0 : index
    %5 = vector.load %arg2[%c0_5, %c0_6] : memref<64x16xf32, #tpu.memory_space<vmem>>, vector<64x16xf32>
    %cst_7 = arith.constant dense<0.000000e+00> : vector<2x16xf32>
    %6 = tpu.matmul %4, %5, %cst_7 {dimension_numbers = #tpu.dot_dimension_numbers<[1], [0], [0], [1], [0, 0, 1, 1], [], []>} : vector<2x64xf32>, vector<64x16xf32>, vector<2x16xf32> -> vector<2x16xf32>
    %c0_8 = arith.constant 0 : index
    %c0_9 = arith.constant 0 : index
    %7 = vector.load %arg5[%c0_8, %c0_9] : memref<2x64xf32, #tpu.memory_space<vmem>>, vector<2x64xf32>
    %c0_10 = arith.constant 0 : index
    %c0_11 = arith.constant 0 : index
    %8 = vector.load %arg2[%c0_10, %c0_11] : memref<64x16xf32, #tpu.memory_space<vmem>>, vector<64x16xf32>
    %cst_12 = arith.constant dense<0.000000e+00> : vector<2x16xf32>
    %9 = tpu.matmul %7, %8, %cst_12 {dimension_numbers = #tpu.dot_dimension_numbers<[1], [0], [0], [1], [0, 0, 1, 1], [], []>} : vector<2x64xf32>, vector<64x16xf32>, vector<2x16xf32> -> vector<2x16xf32>
    %10 = tpu.iota {dimensions = array<i32: 1>} : vector<16x256xi32>
    %11 = vector.broadcast %0 : i32 to vector<16x256xi32>
    %12 = arith.addi %10, %11 : vector<16x256xi32>
    %13 = tpu.iota {dimensions = array<i32: 0>} : vector<16x256xi32>
    %c4_i32 = arith.constant 4 : i32
    %14 = vector.broadcast %c4_i32 : i32 to vector<16x256xi32>
    %15 = arith.shrsi %12, %14 : vector<16x256xi32>
    %c15_i32 = arith.constant 15 : i32
    %16 = vector.broadcast %c15_i32 : i32 to vector<16x256xi32>
    %17 = arith.andi %12, %16 : vector<16x256xi32>
    %18 = arith.cmpi eq, %15, %13 : vector<16x256xi32>
    %19 = arith.extui %18 : vector<16x256xi1> to vector<16x256xi32>
    %20 = arith.sitofp %19 : vector<16x256xi32> to vector<16x256xf32>
    %21 = arith.cmpi eq, %17, %13 : vector<16x256xi32>
    %22 = arith.extui %21 : vector<16x256xi1> to vector<16x256xi32>
    %23 = arith.sitofp %22 : vector<16x256xi32> to vector<16x256xf32>
    %cst_13 = arith.constant dense<0.000000e+00> : vector<2x256xf32>
    %24 = tpu.matmul %6, %20, %cst_13 {dimension_numbers = #tpu.dot_dimension_numbers<[1], [0], [0], [1], [0, 0, 1, 1], [], []>} : vector<2x16xf32>, vector<16x256xf32>, vector<2x256xf32> -> vector<2x256xf32>
    %cst_14 = arith.constant dense<0.000000e+00> : vector<2x256xf32>
    %25 = tpu.matmul %9, %23, %cst_14 {dimension_numbers = #tpu.dot_dimension_numbers<[1], [0], [0], [1], [0, 0, 1, 1], [], []>} : vector<2x16xf32>, vector<16x256xf32>, vector<2x256xf32> -> vector<2x256xf32>
    %26 = arith.addf %3, %24 : vector<2x256xf32>
    %27 = arith.addf %26, %25 : vector<2x256xf32>
    %c0_15 = arith.constant 0 : index
    %c0_16 = arith.constant 0 : index
    %28 = memref.load %arg6[%c0_15, %c0_16] : memref<1x1xf32, #tpu.memory_space<smem>>
    %29 = vector.broadcast %28 : f32 to vector<2x256xf32>
    %30 = arith.addf %27, %29 : vector<2x256xf32>
    %c0_17 = arith.constant 0 : index
    %c0_18 = arith.constant 0 : index
    %31 = vector.load %arg7[%c0_17, %c0_18] : memref<2x256xf32, #tpu.memory_space<vmem>>, vector<2x256xf32>
    tpu.vector_store %arg7[%c0_17, %c0_18], %30 {strides = array<i32>} : memref<2x256xf32, #tpu.memory_space<vmem>>, vector<2x256xf32>,
    return
  }
  func.func @transform_0(%arg0: i32) -> (i32, i32) {
    %c0_i32 = arith.constant 0 : i32
    %c0_i32_0 = arith.constant 0 : i32
    return %c0_i32, %arg0 : i32, i32
  }
  func.func @transform_1(%arg0: i32) -> (i32, i32) {
    %c0_i32 = arith.constant 0 : i32
    %c0_i32_0 = arith.constant 0 : i32
    %c0_i32_1 = arith.constant 0 : i32
    return %c0_i32, %c0_i32_0 : i32, i32
  }
  func.func @transform_2(%arg0: i32) -> (i32, i32) {
    %c0_i32 = arith.constant 0 : i32
    %c0_i32_0 = arith.constant 0 : i32
    %c0_i32_1 = arith.constant 0 : i32
    return %c0_i32, %c0_i32_0 : i32, i32
  }
  func.func @transform_3(%arg0: i32) -> (i32, i32) {
    %c0_i32 = arith.constant 0 : i32
    %c0_i32_0 = arith.constant 0 : i32
    %c0_i32_1 = arith.constant 0 : i32
    return %c0_i32, %c0_i32_0 : i32, i32
  }
  func.func @transform_4(%arg0: i32) -> (i32, i32) {
    %c0_i32 = arith.constant 0 : i32
    %c0_i32_0 = arith.constant 0 : i32
    %c0_i32_1 = arith.constant 0 : i32
    return %c0_i32, %c0_i32_0 : i32, i32
  }
  func.func @transform_5(%arg0: i32) -> (i32, i32) {
    %c0_i32 = arith.constant 0 : i32
    %c0_i32_0 = arith.constant 0 : i32
    %c0_i32_1 = arith.constant 0 : i32
    return %c0_i32, %c0_i32_0 : i32, i32
  }
  func.func @transform_6(%arg0: i32) -> (i32, i32) {
    %c0_i32 = arith.constant 0 : i32
    %c0_i32_0 = arith.constant 0 : i32
    return %c0_i32, %arg0 : i32, i32
  }
}

</mosaic_0001>

<llo_original>
// kernel: affinity_pallas.1
$region0: #{affinity_pallas.1}
  #allocation0 [shape = 'u32[]', space=smem, size = 0x4, offset = 0x4, fixed_abs, tag = 'smem constant byte address 0x4 - core index']
  #allocation1 [shape = 'u32[144,128]{1,0:T(1,128)}', space=vmem, size = 0x12000, scoped, tag = 'internal scratch']
  #allocation2 [shape = 'f32[1,1]{1,0:T(1,128)S(6)}', space=smem, size = 0x200, scoped, tag = 'scoped memory for affinity_pallas.1']
  %s0 = inlined_call_operand.vmem [shape: f32[16,256], index: 0, kind: input, shape index: {}]
  %s1 = inlined_call_operand.vmem [shape: f32[64,16], index: 1, kind: input, shape index: {}]
  %s2 = inlined_call_operand.vmem [shape: f32[2,16], index: 2, kind: input, shape index: {}]
  %s3 = inlined_call_operand.vmem [shape: f32[2,64], index: 3, kind: input, shape index: {}]
  %s4 = inlined_call_operand.vmem [shape: f32[2,64], index: 4, kind: input, shape index: {}]
  %s5 = inlined_call_operand.<no memory space> [shape: f32[1,1], index: 5, kind: input, shape index: {}]
  %s6 = inlined_call_operand.vmem [shape: f32[2,256], index: 6, kind: output, shape index: {}]
  %s7 = sld [smem:[#allocation0]]
  $region34: #{affinity_pallas.1} parent=0
    _
  %s9 = ssub.s32 1, %s7
  %s10 = scalar_select 0, %s9, %s7
  %11 = sst [smem:[#allocation2]] %s5
  // Predicated region
  $region2: #{affinity_pallas.1} parent=0 // pred_check
    _
  $region3: #{affinity_pallas.1} parent=0 // pred_check_branch
    %13 = sbr.rel (0) target = $region5
  $region4: #{affinity_pallas.1} parent=0 // pred_region
    _
  $region5: #{affinity_pallas.1} parent=0 // pred_fallthru
    _
  // Predicated region
  $region6: #{affinity_pallas.1} parent=0 // pred_check
    _
  $region7: #{affinity_pallas.1} parent=0 // pred_check_branch
    %15 = sbr.rel (0) target = $region9
  $region8: #{affinity_pallas.1} parent=0 // pred_region
    _
  $region9: #{affinity_pallas.1} parent=0 // pred_fallthru
    _
  // Predicated region
  $region10: #{affinity_pallas.1} parent=0 // pred_check
    _
  $region11: #{affinity_pallas.1} parent=0 // pred_check_branch
    %17 = sbr.rel (0) target = $region13
  $region12: #{affinity_pallas.1} parent=0 // pred_region
    _
  $region13: #{affinity_pallas.1} parent=0 // pred_fallthru
    _
  // Predicated region
  $region14: #{affinity_pallas.1} parent=0 // pred_check
    _
  $region15: #{affinity_pallas.1} parent=0 // pred_check_branch
    %19 = sbr.rel (0) target = $region17
  $region16: #{affinity_pallas.1} parent=0 // pred_region
    _
  $region17: #{affinity_pallas.1} parent=0 // pred_fallthru
    _
  // Predicated region
  $region18: #{affinity_pallas.1} parent=0 // pred_check
    _
  $region19: #{affinity_pallas.1} parent=0 // pred_check_branch
    %21 = sbr.rel (0) target = $region21
  $region20: #{affinity_pallas.1} parent=0 // pred_region
    _
  $region21: #{affinity_pallas.1} parent=0 // pred_fallthru
    _
  // Predicated region
  $region22: #{affinity_pallas.1} parent=0 // pred_check
    _
  $region23: #{affinity_pallas.1} parent=0 // pred_check_branch
    %23 = sbr.rel (0) target = $region25
  $region24: #{affinity_pallas.1} parent=0 // pred_region
    _
  $region25: #{affinity_pallas.1} parent=0 // pred_fallthru
    _
  %s24 = smul.u32 0, 256
  %v25 = vld [vmem:[%s2] sm:$0x3]
  %v26 = vld [vmem:[%s0] sm:$0xff]
  %v27 = vld [vmem:[%s0 + $0x8] sm:$0xff]
  %v28 = vld [vmem:[%s0 + $0x10] sm:$0xff]
  %v29 = vld [vmem:[%s0 + $0x18] sm:$0xff]
  %v30 = vld [vmem:[%s3] sm:$0x3]
  %v31 = vld [vmem:[%s1] sm:$0xff]
  %v32 = vld [vmem:[%s1 + $0x8] sm:$0xff]
  %v33 = vld [vmem:[%s1 + $0x10] sm:$0xff]
  %v34 = vld [vmem:[%s1 + $0x18] sm:$0xff]
  %v35 = vld [vmem:[%s1 + $0x20] sm:$0xff]
  %v36 = vld [vmem:[%s1 + $0x28] sm:$0xff]
  %v37 = vld [vmem:[%s1 + $0x30] sm:$0xff]
  %v38 = vld [vmem:[%s1 + $0x38] sm:$0xff]
  %vm39 = vcmask 523264
  %v41 = vsel %vm39, %v30, 0
  %43 = vmatprep.subr.mxu0 0.0
  %44 = vmatpush1.msra.mxu0 %v31
  %45 = vmatprep.subr.mxu0 0.0
  %46 = vmatpush1.msra.mxu0 %v32
  %47 = vmatprep.subr.mxu0 0.0
  %48 = vmatpush1.msra.mxu0 %v33
  %49 = vmatprep.subr.mxu0 0.0
  %50 = vmatpush1.msra.mxu0 %v34
  %51 = vmatprep.subr.mxu0 0.0
  %52 = vmatpush1.msra.mxu0 %v35
  %53 = vmatprep.subr.mxu0 0.0
  %54 = vmatpush1.msra.mxu0 %v36
  %55 = vmatprep.subr.mxu0 0.0
  %56 = vmatpush1.msra.mxu0 %v37
  %57 = vmatprep.subr.mxu0 0.0
  %58 = vmatpush1.msra.mxu0 %v38
  %59 = vmatprep.subr.mxu0 0.0
  %60 = vmatpush1.msra.mxu0 0.0
  %61 = vmatprep.subr.mxu0 0.0
  %62 = vmatpush1.msra.mxu0 0.0
  %63 = vmatprep.subr.mxu0 0.0
  %64 = vmatpush1.msra.mxu0 0.0
  %65 = vmatprep.subr.mxu0 0.0
  %66 = vmatpush1.msra.mxu0 0.0
  %67 = vmatprep.subr.mxu0 0.0
  %68 = vmatpush1.msra.mxu0 0.0
  %69 = vmatprep.subr.mxu0 0.0
  %70 = vmatpush1.msra.mxu0 0.0
  %71 = vmatprep.subr.mxu0 0.0
  %72 = vmatpush1.msra.mxu0 0.0
  %73 = vmatprep.subr.mxu0 0.0
  %74 = vmatpush1.msra.mxu0 0.0
  %75 = vmatprep.subr.mxu0 0.0
  %76 = vmatpush1.msra.mxu0 0.0
  %77 = vmatprep.subr.mxu0 0.0
  %78 = vmatpush1.msra.mxu0 0.0
  %79 = vmatprep.subr.mxu0 0.0
  %80 = vmatpush1.msra.mxu0 0.0
  %81 = vmatprep.subr.mxu0 0.0
  %82 = vmatpush1.msra.mxu0 0.0
  %83 = vmatprep.subr.mxu0 0.0
  %84 = vmatpush1.msra.mxu0 0.0
  %85 = vmatprep.subr.mxu0 0.0
  %86 = vmatpush1.msra.mxu0 0.0
  %87 = vmatprep.subr.mxu0 0.0
  %88 = vmatpush1.msra.mxu0 0.0
  %89 = vmatprep.subr.mxu0 0.0
  %90 = vmatpush1.msra.mxu0 0.0
  %91 = vmatprep.subr.mxu0 0.0
  %92 = vmatpush1.msra.mxu0 0.0
  %93 = vmatprep.subr.mxu0 0.0
  %94 = vmatpush1.msra.mxu0 0.0
  %95 = vmatprep.subr.mxu0 0.0
  %96 = vmatpush1.msra.mxu0 0.0
  %97 = vmatprep.subr.mxu0 0.0
  %98 = vmatpush1.msra.mxu0 0.0
  %99 = vmatprep.subr.mxu0 0.0
  %100 = vmatpush1.msra.mxu0 0.0
  %101 = vmatprep.subr.mxu0 0.0
  %102 = vmatpush1.msra.mxu0 0.0
  %103 = vmatprep.subr.mxu0 0.0
  %104 = vmatpush1.msra.mxu0 0.0
  %105 = vmatprep.subr.mxu0 0.0
  %106 = vmatpush1.msra.mxu0 0.0
  %107 = vmatprep.mubr.f32.mxu0 0.0
  %108 = vmatmul.mubr.f32.gmra.mrb[0].mxu0 %v41
  %v109 = vpop.f32.mrb[0].mxu0
  %v110 = vadd.f32 0.0, %v109
  %v111 = vpop.f32.mrb[0].mxu0
  %112 = vdwg.mxu0
  %v113 = vld [vmem:[%s4] sm:$0x3]
  %v115 = vsel %vm39, %v113, 0
  %117 = vmatprep.subr.mxu0 0.0
  %118 = vmatpush1.msra.mxu0 %v31
  %119 = vmatprep.subr.mxu0 0.0
  %120 = vmatpush1.msra.mxu0 %v32
  %121 = vmatprep.subr.mxu0 0.0
  %122 = vmatpush1.msra.mxu0 %v33
  %123 = vmatprep.subr.mxu0 0.0
  %124 = vmatpush1.msra.mxu0 %v34
  %125 = vmatprep.subr.mxu0 0.0
  %126 = vmatpush1.msra.mxu0 %v35
  %127 = vmatprep.subr.mxu0 0.0
  %128 = vmatpush1.msra.mxu0 %v36
  %129 = vmatprep.subr.mxu0 0.0
  %130 = vmatpush1.msra.mxu0 %v37
  %131 = vmatprep.subr.mxu0 0.0
  %132 = vmatpush1.msra.mxu0 %v38
  %133 = vmatprep.subr.mxu0 0.0
  %134 = vmatpush1.msra.mxu0 0.0
  %135 = vmatprep.subr.mxu0 0.0
  %136 = vmatpush1.msra.mxu0 0.0
  %137 = vmatprep.subr.mxu0 0.0
  %138 = vmatpush1.msra.mxu0 0.0
  %139 = vmatprep.subr.mxu0 0.0
  %140 = vmatpush1.msra.mxu0 0.0
  %141 = vmatprep.subr.mxu0 0.0
  %142 = vmatpush1.msra.mxu0 0.0
  %143 = vmatprep.subr.mxu0 0.0
  %144 = vmatpush1.msra.mxu0 0.0
  %145 = vmatprep.subr.mxu0 0.0
  %146 = vmatpush1.msra.mxu0 0.0
  %147 = vmatprep.subr.mxu0 0.0
  %148 = vmatpush1.msra.mxu0 0.0
  %149 = vmatprep.subr.mxu0 0.0
  %150 = vmatpush1.msra.mxu0 0.0
  %151 = vmatprep.subr.mxu0 0.0
  %152 = vmatpush1.msra.mxu0 0.0
  %153 = vmatprep.subr.mxu0 0.0
  %154 = vmatpush1.msra.mxu0 0.0
  %155 = vmatprep.subr.mxu0 0.0
  %156 = vmatpush1.msra.mxu0 0.0
  %157 = vmatprep.subr.mxu0 0.0
  %158 = vmatpush1.msra.mxu0 0.0
  %159 = vmatprep.subr.mxu0 0.0
  %160 = vmatpush1.msra.mxu0 0.0
  %161 = vmatprep.subr.mxu0 0.0
  %162 = vmatpush1.msra.mxu0 0.0
  %163 = vmatprep.subr.mxu0 0.0
  %164 = vmatpush1.msra.mxu0 0.0
  %165 = vmatprep.subr.mxu0 0.0
  %166 = vmatpush1.msra.mxu0 0.0
  %167 = vmatprep.subr.mxu0 0.0
  %168 = vmatpush1.msra.mxu0 0.0
  %169 = vmatprep.subr.mxu0 0.0
  %170 = vmatpush1.msra.mxu0 0.0
  %171 = vmatprep.subr.mxu0 0.0
  %172 = vmatpush1.msra.mxu0 0.0
  %173 = vmatprep.subr.mxu0 0.0
  %174 = vmatpush1.msra.mxu0 0.0
  %175 = vmatprep.subr.mxu0 0.0
  %176 = vmatpush1.msra.mxu0 0.0
  %177 = vmatprep.subr.mxu0 0.0
  %178 = vmatpush1.msra.mxu0 0.0
  %179 = vmatprep.subr.mxu0 0.0
  %180 = vmatpush1.msra.mxu0 0.0
  %181 = vmatprep.mubr.f32.mxu0 0.0
  %182 = vmatmul.mubr.f32.gmra.mrb[0].mxu0 %v115
  %v183 = vpop.f32.mrb[0].mxu0
  %v184 = vadd.f32 0.0, %v183
  %v185 = vpop.f32.mrb[0].mxu0
  %186 = vdwg.mxu0
  %v187 = vlaneseq
  %v188 = vand.u32 %v187, 127
  %v189 = vadd.s32 %v188, 128
  %v190 = vstv %s24
  %v191 = vadd.s32 %v188, %v190
  %v192 = vadd.s32 %v189, %v190
  %v193 = vlaneseq
  %v194 = vshrl.u32 %v193, 7
  %v195 = vadd.s32 %v194, 8
  %v196 = vshra.s32 %v191, 4
  %v197 = vshra.s32 %v192, 4
  %v198 = vand.u32 %v191, 15
  %v199 = vand.u32 %v192, 15
  %vm200 = vcmp.eq.s32.totalorder %v196, %v194
  %vm201 = vcmp.eq.s32.totalorder %v197, %v194
  %vm202 = vcmp.eq.s32.totalorder %v196, %v195
  %vm203 = vcmp.eq.s32.totalorder %v197, %v195
  %v204 = vsel %vm200, 1, 0
  %v205 = vsel %vm201, 1, 0
  %v206 = vsel %vm202, 1, 0
  %v207 = vsel %vm203, 1, 0
  %v208 = vcvt.s32.f32 %v204
  %v209 = vcvt.s32.f32 %v205
  %v210 = vcvt.s32.f32 %v206
  %v211 = vcvt.s32.f32 %v207
  %vm212 = vcmp.eq.s32.totalorder %v198, %v194
  %vm213 = vcmp.eq.s32.totalorder %v199, %v194
  %vm214 = vcmp.eq.s32.totalorder %v198, %v195
  %vm215 = vcmp.eq.s32.totalorder %v199, %v195
  %v216 = vsel %vm212, 1, 0
  %v217 = vsel %vm213, 1, 0
  %v218 = vsel %vm214, 1, 0
  %v219 = vsel %vm215, 1, 0
  %v220 = vcvt.s32.f32 %v216
  %v221 = vcvt.s32.f32 %v217
  %v222 = vcvt.s32.f32 %v218
  %v223 = vcvt.s32.f32 %v219
  %vm224 = vcmask 130048
  %v226 = vsel %vm224, %v110, 0
  %228 = vmatprep.subr.mxu0 %v209
  %229 = vmatpush1.msra.mxu0 %v208
  %230 = vmatprep.subr.mxu0 %v211
  %231 = vmatpush1.msra.mxu0 %v210
  %232 = vmatprep.subr.mxu0 0.0
  %233 = vmatpush1.msra.mxu0 0.0
  %234 = vmatprep.subr.mxu0 0.0
  %235 = vmatpush1.msra.mxu0 0.0
  %236 = vmatprep.subr.mxu0 0.0
  %237 = vmatpush1.msra.mxu0 0.0
  %238 = vmatprep.subr.mxu0 0.0
  %239 = vmatpush1.msra.mxu0 0.0
  %240 = vmatprep.subr.mxu0 0.0
  %241 = vmatpush1.msra.mxu0 0.0
  %242 = vmatprep.subr.mxu0 0.0
  %243 = vmatpush1.msra.mxu0 0.0
  %244 = vmatprep.subr.mxu0 0.0
  %245 = vmatpush1.msra.mxu0 0.0
  %246 = vmatprep.subr.mxu0 0.0
  %247 = vmatpush1.msra.mxu0 0.0
  %248 = vmatprep.subr.mxu0 0.0
  %249 = vmatpush1.msra.mxu0 0.0
  %250 = vmatprep.subr.mxu0 0.0
  %251 = vmatpush1.msra.mxu0 0.0
  %252 = vmatprep.subr.mxu0 0.0
  %253 = vmatpush1.msra.mxu0 0.0
  %254 = vmatprep.subr.mxu0 0.0
  %255 = vmatpush1.msra.mxu0 0.0
  %256 = vmatprep.subr.mxu0 0.0
  %257 = vmatpush1.msra.mxu0 0.0
  %258 = vmatprep.subr.mxu0 0.0
  %259 = vmatpush1.msra.mxu0 0.0
  %260 = vmatprep.subr.mxu0 0.0
  %261 = vmatpush1.msra.mxu0 0.0
  %262 = vmatprep.subr.mxu0 0.0
  %263 = vmatpush1.msra.mxu0 0.0
  %264 = vmatprep.subr.mxu0 0.0
  %265 = vmatpush1.msra.mxu0 0.0
  %266 = vmatprep.subr.mxu0 0.0
  %267 = vmatpush1.msra.mxu0 0.0
  %268 = vmatprep.subr.mxu0 0.0
  %269 = vmatpush1.msra.mxu0 0.0
  %270 = vmatprep.subr.mxu0 0.0
  %271 = vmatpush1.msra.mxu0 0.0
  %272 = vmatprep.subr.mxu0 0.0
  %273 = vmatpush1.msra.mxu0 0.0
  %274 = vmatprep.subr.mxu0 0.0
  %275 = vmatpush1.msra.mxu0 0.0
  %276 = vmatprep.subr.mxu0 0.0
  %277 = vmatpush1.msra.mxu0 0.0
  %278 = vmatprep.subr.mxu0 0.0
  %279 = vmatpush1.msra.mxu0 0.0
  %280 = vmatprep.subr.mxu0 0.0
  %281 = vmatpush1.msra.mxu0 0.0
  %282 = vmatprep.subr.mxu0 0.0
  %283 = vmatpush1.msra.mxu0 0.0
  %284 = vmatprep.subr.mxu0 0.0
  %285 = vmatpush1.msra.mxu0 0.0
  %286 = vmatprep.subr.mxu0 0.0
  %287 = vmatpush1.msra.mxu0 0.0
  %288 = vmatprep.subr.mxu0 0.0
  %289 = vmatpush1.msra.mxu0 0.0
  %290 = vmatprep.subr.mxu0 0.0
  %291 = vmatpush1.msra.mxu0 0.0
  %292 = vmatprep.mubr.f32.mxu0 0.0
  %293 = vmatmul.mubr.f32.gmra.mrb[0].mxu0 %v226
  %v294 = vpop.f32.mrb[0].mxu0
  %v295 = vadd.f32 0.0, %v294
  %v296 = vpop.f32.mrb[0].mxu0
  %v297 = vadd.f32 0.0, %v296
  %298 = vdwg.mxu0
  %v300 = vsel %vm224, %v184, 0
  %302 = vmatprep.subr.mxu0 %v221
  %303 = vmatpush1.msra.mxu0 %v220
  %304 = vmatprep.subr.mxu0 %v223
  %305 = vmatpush1.msra.mxu0 %v222
  %306 = vmatprep.subr.mxu0 0.0
  %307 = vmatpush1.msra.mxu0 0.0
  %308 = vmatprep.subr.mxu0 0.0
  %309 = vmatpush1.msra.mxu0 0.0
  %310 = vmatprep.subr.mxu0 0.0
  %311 = vmatpush1.msra.mxu0 0.0
  %312 = vmatprep.subr.mxu0 0.0
  %313 = vmatpush1.msra.mxu0 0.0
  %314 = vmatprep.subr.mxu0 0.0
  %315 = vmatpush1.msra.mxu0 0.0
  %316 = vmatprep.subr.mxu0 0.0
  %317 = vmatpush1.msra.mxu0 0.0
  %318 = vmatprep.subr.mxu0 0.0
  %319 = vmatpush1.msra.mxu0 0.0
  %320 = vmatprep.subr.mxu0 0.0
  %321 = vmatpush1.msra.mxu0 0.0
  %322 = vmatprep.subr.mxu0 0.0
  %323 = vmatpush1.msra.mxu0 0.0
  %324 = vmatprep.subr.mxu0 0.0
  %325 = vmatpush1.msra.mxu0 0.0
  %326 = vmatprep.subr.mxu0 0.0
  %327 = vmatpush1.msra.mxu0 0.0
  %328 = vmatprep.subr.mxu0 0.0
  %329 = vmatpush1.msra.mxu0 0.0
  %330 = vmatprep.subr.mxu0 0.0
  %331 = vmatpush1.msra.mxu0 0.0
  %332 = vmatprep.subr.mxu0 0.0
  %333 = vmatpush1.msra.mxu0 0.0
  %334 = vmatprep.subr.mxu0 0.0
  %335 = vmatpush1.msra.mxu0 0.0
  %336 = vmatprep.subr.mxu0 0.0
  %337 = vmatpush1.msra.mxu0 0.0
  %338 = vmatprep.subr.mxu0 0.0
  %339 = vmatpush1.msra.mxu0 0.0
  %340 = vmatprep.subr.mxu0 0.0
  %341 = vmatpush1.msra.mxu0 0.0
  %342 = vmatprep.subr.mxu0 0.0
  %343 = vmatpush1.msra.mxu0 0.0
  %344 = vmatprep.subr.mxu0 0.0
  %345 = vmatpush1.msra.mxu0 0.0
  %346 = vmatprep.subr.mxu0 0.0
  %347 = vmatpush1.msra.mxu0 0.0
  %348 = vmatprep.subr.mxu0 0.0
  %349 = vmatpush1.msra.mxu0 0.0
  %350 = vmatprep.subr.mxu0 0.0
  %351 = vmatpush1.msra.mxu0 0.0
  %352 = vmatprep.subr.mxu0 0.0
  %353 = vmatpush1.msra.mxu0 0.0
  %354 = vmatprep.subr.mxu0 0.0
  %355 = vmatpush1.msra.mxu0 0.0
  %356 = vmatprep.subr.mxu0 0.0
  %357 = vmatpush1.msra.mxu0 0.0
  %358 = vmatprep.subr.mxu0 0.0
  %359 = vmatpush1.msra.mxu0 0.0
  %360 = vmatprep.subr.mxu0 0.0
  %361 = vmatpush1.msra.mxu0 0.0
  %362 = vmatprep.subr.mxu0 0.0
  %363 = vmatpush1.msra.mxu0 0.0
  %364 = vmatprep.subr.mxu0 0.0
  %365 = vmatpush1.msra.mxu0 0.0
  %366 = vmatprep.mubr.f32.mxu0 0.0
  %367 = vmatmul.mubr.f32.gmra.mrb[0].mxu0 %v300
  %v368 = vpop.f32.mrb[0].mxu0
  %v369 = vadd.f32 0.0, %v368
  %v370 = vpop.f32.mrb[0].mxu0
  %v371 = vadd.f32 0.0, %v370
  %372 = vdwg.mxu0
  %v374 = vsel %vm224, %v25, 0
  %376 = vmatprep.subr.mxu0 %v27
  %377 = vmatpush1.msra.mxu0 %v26
  %378 = vmatprep.subr.mxu0 %v29
  %379 = vmatpush1.msra.mxu0 %v28
  %380 = vmatprep.subr.mxu0 0.0
  %381 = vmatpush1.msra.mxu0 0.0
  %382 = vmatprep.subr.mxu0 0.0
  %383 = vmatpush1.msra.mxu0 0.0
  %384 = vmatprep.subr.mxu0 0.0
  %385 = vmatpush1.msra.mxu0 0.0
  %386 = vmatprep.subr.mxu0 0.0
  %387 = vmatpush1.msra.mxu0 0.0
  %388 = vmatprep.subr.mxu0 0.0
  %389 = vmatpush1.msra.mxu0 0.0
  %390 = vmatprep.subr.mxu0 0.0
  %391 = vmatpush1.msra.mxu0 0.0
  %392 = vmatprep.subr.mxu0 0.0
  %393 = vmatpush1.msra.mxu0 0.0
  %394 = vmatprep.subr.mxu0 0.0
  %395 = vmatpush1.msra.mxu0 0.0
  %396 = vmatprep.subr.mxu0 0.0
  %397 = vmatpush1.msra.mxu0 0.0
  %398 = vmatprep.subr.mxu0 0.0
  %399 = vmatpush1.msra.mxu0 0.0
  %400 = vmatprep.subr.mxu0 0.0
  %401 = vmatpush1.msra.mxu0 0.0
  %402 = vmatprep.subr.mxu0 0.0
  %403 = vmatpush1.msra.mxu0 0.0
  %404 = vmatprep.subr.mxu0 0.0
  %405 = vmatpush1.msra.mxu0 0.0
  %406 = vmatprep.subr.mxu0 0.0
  %407 = vmatpush1.msra.mxu0 0.0
  %408 = vmatprep.subr.mxu0 0.0
  %409 = vmatpush1.msra.mxu0 0.0
  %410 = vmatprep.subr.mxu0 0.0
  %411 = vmatpush1.msra.mxu0 0.0
  %412 = vmatprep.subr.mxu0 0.0
  %413 = vmatpush1.msra.mxu0 0.0
  %414 = vmatprep.subr.mxu0 0.0
  %415 = vmatpush1.msra.mxu0 0.0
  %416 = vmatprep.subr.mxu0 0.0
  %417 = vmatpush1.msra.mxu0 0.0
  %418 = vmatprep.subr.mxu0 0.0
  %419 = vmatpush1.msra.mxu0 0.0
  %420 = vmatprep.subr.mxu0 0.0
  %421 = vmatpush1.msra.mxu0 0.0
  %422 = vmatprep.subr.mxu0 0.0
  %423 = vmatpush1.msra.mxu0 0.0
  %424 = vmatprep.subr.mxu0 0.0
  %425 = vmatpush1.msra.mxu0 0.0
  %426 = vmatprep.subr.mxu0 0.0
  %427 = vmatpush1.msra.mxu0 0.0
  %428 = vmatprep.subr.mxu0 0.0
  %429 = vmatpush1.msra.mxu0 0.0
  %430 = vmatprep.subr.mxu0 0.0
  %431 = vmatpush1.msra.mxu0 0.0
  %432 = vmatprep.subr.mxu0 0.0
  %433 = vmatpush1.msra.mxu0 0.0
  %434 = vmatprep.subr.mxu0 0.0
  %435 = vmatpush1.msra.mxu0 0.0
  %436 = vmatprep.subr.mxu0 0.0
  %437 = vmatpush1.msra.mxu0 0.0
  %438 = vmatprep.subr.mxu0 0.0
  %439 = vmatpush1.msra.mxu0 0.0
  %440 = vmatprep.mubr.f32.mxu0 0.0
  %441 = vmatmul.mubr.f32.gmra.mrb[0].mxu0 %v374
  %v442 = vpop.f32.mrb[0].mxu0
  %v443 = vadd.f32 %v295, %v442
  %v444 = vpop.f32.mrb[0].mxu0
  %v445 = vadd.f32 %v297, %v444
  %446 = vdwg.mxu0
  %v447 = vadd.f32 %v443, %v369
  %v448 = vadd.f32 %v445, %v371
  %s449 = sld [smem:[#allocation2]]
  %v450 = vstv %s449
  %v451 = vadd.f32 %v447, %v450
  %v452 = vadd.f32 %v448, %v450
  %v455 = vcombine.low %v451, %v452
  %v457 = vunpack.c.l.s4 1983009808
  %v458 = vunpack.c.0.s8 %v457
  %v459 = vlaneseq
  %v460 = vshrl.u32 %v459, 7
  %v461 = vsub.s32 %v458, %v460
  %v462 = vrot.slane %v455, %v461
  %464 = vst [vmem:[%s6] sm:$0xf] %v462
  // Predicated region
  $region26: #{affinity_pallas.1} parent=0 // pred_check
    _
  $region27: #{affinity_pallas.1} parent=0 // pred_check_branch
    %466 = sbr.rel (0) target = $region29
  $region28: #{affinity_pallas.1} parent=0 // pred_region
    _
  $region29: #{affinity_pallas.1} parent=0 // pred_fallthru
    _
  // Predicated region
  $region30: #{affinity_pallas.1} parent=0 // pred_check
    _
  $region31: #{affinity_pallas.1} parent=0 // pred_check_branch
    %468 = sbr.rel (0) target = $region33
  $region32: #{affinity_pallas.1} parent=0 // pred_region
    _
  $region33: #{affinity_pallas.1} parent=0 // pred_fallthru
    _

</llo_original>
